<compile_context>
chip_gen: v5e
topology: v5e:2x2
jax: 0.10.0
libtpu: 0.0.40
codegen_flags: <defaults>
</compile_context>

<pallas_src>
import jax
import jax.numpy as jnp
from jax.experimental import pallas as pl
from jax.experimental.pallas import tpu as pltpu

HIDDEN = 128
LANE = 128


def _round_up(x, m):
    return ((x + m - 1) // m) * m


def _mlp_kernel(x_ref, w1_ref, b1_ref, w2_ref, b2_ref, w3_ref, b3_ref, o_ref):
    # x: (TILE_B, IN_PAD) bf16 ; w1: (IN_PAD, H) bf16 ; w2: (H, H) bf16
    # b1/b2: (1, H) f32 ; w3: (H, 1) f32 ; b3: (1, 1) f32 ; o: (1, TILE_B) f32
    x = x_ref[...]
    h1 = jnp.dot(x, w1_ref[...], preferred_element_type=jnp.float32) + b1_ref[...]
    h1 = jnp.maximum(h1, 0.0).astype(w2_ref.dtype)          # back to bf16 for the MXU
    h2 = jnp.dot(h1, w2_ref[...], preferred_element_type=jnp.float32) + b2_ref[...]
    h2 = jnp.maximum(h2, 0.0)                                # (TILE_B, H) f32

    # Final Linear(H -> 1): instead of an N=1 MXU matmul (wastes a full MXU pass
    # and forces masked 1-lane stores), transpose h2 on the idle XLU (both dims
    # are 128-multiples) and do a VPU multiply + sublane reduction so the batch
    # lands on the lane axis -> lane-dense store.
    h2_t = jnp.transpose(h2)                                 # (H, TILE_B)
    out = jnp.sum(h2_t * w3_ref[...], axis=0, keepdims=True)  # (1, TILE_B)
    o_ref[...] = (out + b3_ref[...]).astype(o_ref.dtype)


def value_network_forward(x, params, *, tile_b=None):
    """x: [B, input_size] float32 -> [B, 1] float32."""
    B, in_size = x.shape
    hidden = params["w1"].shape[1]

    # Lane-align the feature dim; tile + pad the batch dim.
    in_pad = _round_up(max(in_size, 1), LANE)
    if tile_b is None:
        # multiple of 128 (v5e MXU rows); 512 is also a 256-multiple for v6e/v7x
        tile_b = min(512, _round_up(max(B, 1), LANE))
    b_pad = _round_up(max(B, 1), tile_b)
    grid_b = b_pad // tile_b

    # bf16 MXU operands, f32 accumulation. Zero-padding is exact for the math.
    x_p = jnp.pad(x.astype(jnp.bfloat16), ((0, b_pad - B), (0, in_pad - in_size)))
    w1 = jnp.pad(params["w1"].astype(jnp.bfloat16), ((0, in_pad - in_size), (0, 0)))
    w2 = params["w2"].astype(jnp.bfloat16)
    b1 = params["b1"].astype(jnp.float32)
    b2 = params["b2"].astype(jnp.float32)
    w3 = params["w3"].astype(jnp.float32)      # (hidden, 1), stays f32 (VPU path)
    b3 = params["b3"].astype(jnp.float32)      # (1, 1)

    # Weights/biases: same block every iteration -> resident in VMEM (no re-DMA).
    const = lambda a: pl.BlockSpec(a.shape, lambda i: (0,) * a.ndim)

    out = pl.pallas_call(
        _mlp_kernel,
        out_shape=jax.ShapeDtypeStruct((1, b_pad), jnp.float32),
        grid=(grid_b,),
        in_specs=[
            pl.BlockSpec((tile_b, in_pad), lambda i: (i, 0)),   # x: batch-tiled
            const(w1), const(b1), const(w2), const(b2), const(w3), const(b3),
        ],
        out_specs=pl.BlockSpec((1, tile_b), lambda i: (0, i)),  # lane-dense output
        compiler_params=pltpu.CompilerParams(
            dimension_semantics=("parallel",),                  # v7x: 2 TCs share batch
        ),
    )(x_p, w1, b1, w2, b2, w3, b3)

    return out[0, :B].reshape(B, 1)


def init_params(key, input_size, hidden=HIDDEN):
    """Deterministic init mimicking PyTorch's U(-1/sqrt(fan_in), 1/sqrt(fan_in))."""
    ks = jax.random.split(key, 6)

    def linear(kw, kb, fan_in, fan_out):
        bound = 1.0 / jnp.sqrt(jnp.float32(fan_in))
        w = jax.random.uniform(kw, (fan_in, fan_out), jnp.float32, -bound, bound)
        b = jax.random.uniform(kb, (1, fan_out), jnp.float32, -bound, bound)
        return w, b

    w1, b1 = linear(ks[0], ks[1], input_size, hidden)
    w2, b2 = linear(ks[2], ks[3], hidden, hidden)
    w3, b3 = linear(ks[4], ks[5], hidden, 1)
    return {"w1": w1, "b1": b1, "w2": w2, "b2": b2, "w3": w3, "b3": b3}


def _reference_f32(x, p):
    h1 = jnp.maximum(x @ p["w1"] + p["b1"], 0.0)
    h2 = jnp.maximum(h1 @ p["w2"] + p["b2"], 0.0)
    return h2 @ p["w3"] + p["b3"]


def _reference_bf16(x, p):
    # Mirrors the kernel's numerics: bf16 matmul operands, f32 accumulation.
    xq = x.astype(jnp.bfloat16)
    w1q = p["w1"].astype(jnp.bfloat16)
    w2q = p["w2"].astype(jnp.bfloat16)
    h1 = jnp.maximum(jnp.dot(xq, w1q, preferred_element_type=jnp.float32) + p["b1"], 0.0)
    h1 = h1.astype(jnp.bfloat16)
    h2 = jnp.maximum(jnp.dot(h1, w2q, preferred_element_type=jnp.float32) + p["b2"], 0.0)
    return h2 @ p["w3"] + p["b3"]


if __name__ == "__main__":
    key = jax.random.PRNGKey(0)
    k_x, k_p = jax.random.split(key)

    # NOTE: at this size the kernel is launch-overhead-bound; in real use, stack
    # many environments/evaluations into the batch dim before calling.
    batch, input_size = 8, 32
    x = jax.random.normal(k_x, (batch, input_size), dtype=jnp.float32)
    params = init_params(k_p, input_size)

    fwd = jax.jit(value_network_forward)
    out = jax.block_until_ready(fwd(x, params))

    assert out.shape == (batch, 1), out.shape

    ref_q = _reference_bf16(x, params)     # same quantization as the kernel
    ref_f = _reference_f32(x, params)      # exact fp32 module semantics
    assert jnp.allclose(out, ref_q, atol=2e-3, rtol=2e-3), \
        float(jnp.max(jnp.abs(out - ref_q)))
    assert jnp.allclose(out, ref_f, atol=2e-2, rtol=2e-2), \
        float(jnp.max(jnp.abs(out - ref_f)))

    print("KERNEL_OK")
</pallas_src>

<mosaic_0001>
module attributes {stable_mosaic.version = 11 : i64} {
  func.func @_mlp_kernel(%arg0: i32, %arg1: memref<128x128xbf16, #tpu.memory_space<vmem>>, %arg2: memref<128x128xbf16, #tpu.memory_space<vmem>>, %arg3: memref<1x128xf32, #tpu.memory_space<vmem>>, %arg4: memref<128x128xbf16, #tpu.memory_space<vmem>>, %arg5: memref<1x128xf32, #tpu.memory_space<vmem>>, %arg6: memref<128x1xf32, #tpu.memory_space<vmem>>, %arg7: memref<1x1xf32, #tpu.memory_space<vmem>>, %arg8: memref<1x128xf32, #tpu.memory_space<vmem>>) attributes {dimension_semantics = [#tpu.dimension_semantics<parallel>], iteration_bounds = array<i64: 1>, scalar_prefetch = 0 : i64, scratch_operands = 0 : i64, tpu.core_type = #tpu.core_type<tc>, window_params = [{transform_indices = @transform_0, window_bounds = array<i64: 128, 128>}, {pipeline_mode = #tpu.pipeline_mode<synchronous>, transform_indices = @transform_1, window_bounds = array<i64: 128, 128>}, {pipeline_mode = #tpu.pipeline_mode<synchronous>, transform_indices = @transform_2, window_bounds = array<i64: 1, 128>}, {pipeline_mode = #tpu.pipeline_mode<synchronous>, transform_indices = @transform_3, window_bounds = array<i64: 128, 128>}, {pipeline_mode = #tpu.pipeline_mode<synchronous>, transform_indices = @transform_4, window_bounds = array<i64: 1, 128>}, {pipeline_mode = #tpu.pipeline_mode<synchronous>, transform_indices = @transform_5, window_bounds = array<i64: 128, 1>}, {pipeline_mode = #tpu.pipeline_mode<synchronous>, transform_indices = @transform_6, window_bounds = array<i64: 1, 1>}, {transform_indices = @transform_7, window_bounds = array<i64: 1, 128>}]} {
    %c0 = arith.constant 0 : index
    %c0_0 = arith.constant 0 : index
    %0 = vector.load %arg1[%c0, %c0_0] : memref<128x128xbf16, #tpu.memory_space<vmem>>, vector<128x128xbf16>
    %c0_1 = arith.constant 0 : index
    %c0_2 = arith.constant 0 : index
    %1 = vector.load %arg2[%c0_1, %c0_2] : memref<128x128xbf16, #tpu.memory_space<vmem>>, vector<128x128xbf16>
    %cst = arith.constant dense<0.000000e+00> : vector<128x128xf32>
    %2 = tpu.matmul %0, %1, %cst {dimension_numbers = #tpu.dot_dimension_numbers<[1], [0], [0], [1], [0, 0, 1, 1], [], []>} : vector<128x128xbf16>, vector<128x128xbf16>, vector<128x128xf32> -> vector<128x128xf32>
    %c0_3 = arith.constant 0 : index
    %c0_4 = arith.constant 0 : index
    %3 = vector.load %arg3[%c0_3, %c0_4] : memref<1x128xf32, #tpu.memory_space<vmem>>, vector<1x128xf32>
    %4 = vector.broadcast %3 : vector<1x128xf32> to vector<128x128xf32>
    %5 = arith.addf %2, %4 : vector<128x128xf32>
    %cst_5 = arith.constant 0.000000e+00 : f32
    %6 = vector.broadcast %cst_5 : f32 to vector<128x128xf32>
    %7 = arith.maximumf %5, %6 : vector<128x128xf32>
    %8 = arith.truncf %7 : vector<128x128xf32> to vector<128x128xbf16>
    %c0_6 = arith.constant 0 : index
    %c0_7 = arith.constant 0 : index
    %9 = vector.load %arg4[%c0_6, %c0_7] : memref<128x128xbf16, #tpu.memory_space<vmem>>, vector<128x128xbf16>
    %cst_8 = arith.constant dense<0.000000e+00> : vector<128x128xf32>
    %10 = tpu.matmul %8, %9, %cst_8 {dimension_numbers = #tpu.dot_dimension_numbers<[1], [0], [0], [1], [0, 0, 1, 1], [], []>} : vector<128x128xbf16>, vector<128x128xbf16>, vector<128x128xf32> -> vector<128x128xf32>
    %c0_9 = arith.constant 0 : index
    %c0_10 = arith.constant 0 : index
    %11 = vector.load %arg5[%c0_9, %c0_10] : memref<1x128xf32, #tpu.memory_space<vmem>>, vector<1x128xf32>
    %12 = vector.broadcast %11 : vector<1x128xf32> to vector<128x128xf32>
    %13 = arith.addf %10, %12 : vector<128x128xf32>
    %cst_11 = arith.constant 0.000000e+00 : f32
    %14 = vector.broadcast %cst_11 : f32 to vector<128x128xf32>
    %15 = arith.maximumf %13, %14 : vector<128x128xf32>
    %16 = tpu.transpose %15, [1, 0] : vector<128x128xf32> -> vector<128x128xf32>
    %c0_12 = arith.constant 0 : index
    %c0_13 = arith.constant 0 : index
    %17 = vector.load %arg6[%c0_12, %c0_13] : memref<128x1xf32, #tpu.memory_space<vmem>>, vector<128x1xf32>
    %18 = vector.broadcast %17 : vector<128x1xf32> to vector<128x128xf32>
    %19 = arith.mulf %16, %18 : vector<128x128xf32>
    %cst_14 = arith.constant dense<0.000000e+00> : vector<128xf32>
    %20 = vector.multi_reduction <add>, %19, %cst_14 [0] : vector<128x128xf32> to vector<128xf32>
    %21 = vector.shape_cast %20 : vector<128xf32> to vector<1x128xf32>
    %c0_15 = arith.constant 0 : index
    %c0_16 = arith.constant 0 : index
    %22 = vector.load %arg7[%c0_15, %c0_16] : memref<1x1xf32, #tpu.memory_space<vmem>>, vector<1x1xf32>
    %23 = vector.broadcast %22 : vector<1x1xf32> to vector<1x128xf32>
    %24 = arith.addf %21, %23 : vector<1x128xf32>
    %c0_17 = arith.constant 0 : index
    %c0_18 = arith.constant 0 : index
    %25 = vector.load %arg8[%c0_17, %c0_18] : memref<1x128xf32, #tpu.memory_space<vmem>>, vector<1x128xf32>
    tpu.vector_store %arg8[%c0_17, %c0_18], %24 {strides = array<i32>} : memref<1x128xf32, #tpu.memory_space<vmem>>, vector<1x128xf32>,
    return
  }
  func.func @transform_0(%arg0: i32) -> (i32, i32) {
    %c0_i32 = arith.constant 0 : i32
    %c0_i32_0 = arith.constant 0 : i32
    return %arg0, %c0_i32 : i32, i32
  }
  func.func @transform_1(%arg0: i32) -> (i32, i32) {
    %c0_i32 = arith.constant 0 : i32
    %c0_i32_0 = arith.constant 0 : i32
    %c0_i32_1 = arith.constant 0 : i32
    return %c0_i32, %c0_i32_0 : i32, i32
  }
  func.func @transform_2(%arg0: i32) -> (i32, i32) {
    %c0_i32 = arith.constant 0 : i32
    %c0_i32_0 = arith.constant 0 : i32
    %c0_i32_1 = arith.constant 0 : i32
    return %c0_i32, %c0_i32_0 : i32, i32
  }
  func.func @transform_3(%arg0: i32) -> (i32, i32) {
    %c0_i32 = arith.constant 0 : i32
    %c0_i32_0 = arith.constant 0 : i32
    %c0_i32_1 = arith.constant 0 : i32
    return %c0_i32, %c0_i32_0 : i32, i32
  }
  func.func @transform_4(%arg0: i32) -> (i32, i32) {
    %c0_i32 = arith.constant 0 : i32
    %c0_i32_0 = arith.constant 0 : i32
    %c0_i32_1 = arith.constant 0 : i32
    return %c0_i32, %c0_i32_0 : i32, i32
  }
  func.func @transform_5(%arg0: i32) -> (i32, i32) {
    %c0_i32 = arith.constant 0 : i32
    %c0_i32_0 = arith.constant 0 : i32
    %c0_i32_1 = arith.constant 0 : i32
    return %c0_i32, %c0_i32_0 : i32, i32
  }
  func.func @transform_6(%arg0: i32) -> (i32, i32) {
    %c0_i32 = arith.constant 0 : i32
    %c0_i32_0 = arith.constant 0 : i32
    %c0_i32_1 = arith.constant 0 : i32
    return %c0_i32, %c0_i32_0 : i32, i32
  }
  func.func @transform_7(%arg0: i32) -> (i32, i32) {
    %c0_i32 = arith.constant 0 : i32
    %c0_i32_0 = arith.constant 0 : i32
    return %c0_i32, %arg0 : i32, i32
  }
}

</mosaic_0001>

<llo_original>
// kernel: value_network_forward.1
$region0: #{value_network_forward.1}
  #allocation0 [shape = 'u32[]', space=smem, size = 0x4, offset = 0x4, fixed_abs, tag = 'smem constant byte address 0x4 - core index']
  #allocation1 [shape = 'u32[72,128]{1,0:T(1,128)}', space=vmem, size = 0x9000, scoped, tag = 'internal scratch']
  #allocation2 [shape = 'f32[1,1]{1,0:T(1,128)S(1)}', space=vmem, size = 0x200, scoped, tag = 'scoped memory for value_network_forward.1']
  %s0 = inlined_call_operand.vmem [shape: bf16[128,128], index: 0, kind: input, shape index: {}]
  %s1 = inlined_call_operand.vmem [shape: bf16[128,128], index: 1, kind: input, shape index: {}]
  %s2 = inlined_call_operand.vmem [shape: f32[1,128], index: 2, kind: input, shape index: {}]
  %s3 = inlined_call_operand.vmem [shape: bf16[128,128], index: 3, kind: input, shape index: {}]
  %s4 = inlined_call_operand.vmem [shape: f32[1,128], index: 4, kind: input, shape index: {}]
  %s5 = inlined_call_operand.vmem [shape: f32[128,1], index: 5, kind: input, shape index: {}]
  %s6 = inlined_call_operand.<no memory space> [shape: f32[1,1], index: 6, kind: input, shape index: {}]
  %s7 = inlined_call_operand.vmem [shape: f32[1,128], index: 7, kind: output, shape index: {}]
  %s8 = sld [smem:[#allocation0]]
  $region38: #{value_network_forward.1} parent=0
    _
  %s10 = ssub.s32 1, %s8
  %s11 = scalar_select 0, %s10, %s8
  %v12 = vstv %s6
  %13 = vst [vmem:[#allocation2] sm:$0x1] %v12
  // Predicated region
  $region2: #{value_network_forward.1} parent=0 // pred_check
    _
  $region3: #{value_network_forward.1} parent=0 // pred_check_branch
    %15 = sbr.rel (0) target = $region5
  $region4: #{value_network_forward.1} parent=0 // pred_region
    _
  $region5: #{value_network_forward.1} parent=0 // pred_fallthru
    _
  // Predicated region
  $region6: #{value_network_forward.1} parent=0 // pred_check
    _
  $region7: #{value_network_forward.1} parent=0 // pred_check_branch
    %17 = sbr.rel (0) target = $region9
  $region8: #{value_network_forward.1} parent=0 // pred_region
    _
  $region9: #{value_network_forward.1} parent=0 // pred_fallthru
    _
  // Predicated region
  $region10: #{value_network_forward.1} parent=0 // pred_check
    _
  $region11: #{value_network_forward.1} parent=0 // pred_check_branch
    %19 = sbr.rel (0) target = $region13
  $region12: #{value_network_forward.1} parent=0 // pred_region
    _
  $region13: #{value_network_forward.1} parent=0 // pred_fallthru
    _
  // Predicated region
  $region14: #{value_network_forward.1} parent=0 // pred_check
    _
  $region15: #{value_network_forward.1} parent=0 // pred_check_branch
    %21 = sbr.rel (0) target = $region17
  $region16: #{value_network_forward.1} parent=0 // pred_region
    _
  $region17: #{value_network_forward.1} parent=0 // pred_fallthru
    _
  // Predicated region
  $region18: #{value_network_forward.1} parent=0 // pred_check
    _
  $region19: #{value_network_forward.1} parent=0 // pred_check_branch
    %23 = sbr.rel (0) target = $region21
  $region20: #{value_network_forward.1} parent=0 // pred_region
    _
  $region21: #{value_network_forward.1} parent=0 // pred_fallthru
    _
  // Predicated region
  $region22: #{value_network_forward.1} parent=0 // pred_check
    _
  $region23: #{value_network_forward.1} parent=0 // pred_check_branch
    %25 = sbr.rel (0) target = $region25
  $region24: #{value_network_forward.1} parent=0 // pred_region
    _
  $region25: #{value_network_forward.1} parent=0 // pred_fallthru
    _
  // Predicated region
  $region26: #{value_network_forward.1} parent=0 // pred_check
    _
  $region27: #{value_network_forward.1} parent=0 // pred_check_branch
    %27 = sbr.rel (0) target = $region29
  $region28: #{value_network_forward.1} parent=0 // pred_region
    _
  $region29: #{value_network_forward.1} parent=0 // pred_fallthru
    _
  %v28 = vld [vmem:[%s0] sm:$0xf]
  %v29 = vld [vmem:[%s0 + $0x4] sm:$0xf]
  %v30 = vld [vmem:[%s0 + $0x8] sm:$0xf]
  %v31 = vld [vmem:[%s0 + $0xc] sm:$0xf]
  %v32 = vld [vmem:[%s0 + $0x10] sm:$0xf]
  %v33 = vld [vmem:[%s0 + $0x14] sm:$0xf]
  %v34 = vld [vmem:[%s0 + $0x18] sm:$0xf]
  %v35 = vld [vmem:[%s0 + $0x1c] sm:$0xf]
  %v36 = vld [vmem:[%s0 + $0x20] sm:$0xf]
  %v37 = vld [vmem:[%s0 + $0x24] sm:$0xf]
  %v38 = vld [vmem:[%s0 + $0x28] sm:$0xf]
  %v39 = vld [vmem:[%s0 + $0x2c] sm:$0xf]
  %v40 = vld [vmem:[%s0 + $0x30] sm:$0xf]
  %v41 = vld [vmem:[%s0 + $0x34] sm:$0xf]
  %v42 = vld [vmem:[%s0 + $0x38] sm:$0xf]
  %v43 = vld [vmem:[%s0 + $0x3c] sm:$0xf]
  %v44 = vld [vmem:[%s1] sm:$0xf]
  %v45 = vld [vmem:[%s1 + $0x4] sm:$0xf]
  %v46 = vld [vmem:[%s1 + $0x8] sm:$0xf]
  %v47 = vld [vmem:[%s1 + $0xc] sm:$0xf]
  %v48 = vld [vmem:[%s1 + $0x10] sm:$0xf]
  %v49 = vld [vmem:[%s1 + $0x14] sm:$0xf]
  %v50 = vld [vmem:[%s1 + $0x18] sm:$0xf]
  %v51 = vld [vmem:[%s1 + $0x1c] sm:$0xf]
  %v52 = vld [vmem:[%s1 + $0x20] sm:$0xf]
  %v53 = vld [vmem:[%s1 + $0x24] sm:$0xf]
  %v54 = vld [vmem:[%s1 + $0x28] sm:$0xf]
  %v55 = vld [vmem:[%s1 + $0x2c] sm:$0xf]
  %v56 = vld [vmem:[%s1 + $0x30] sm:$0xf]
  %v57 = vld [vmem:[%s1 + $0x34] sm:$0xf]
  %v58 = vld [vmem:[%s1 + $0x38] sm:$0xf]
  %v59 = vld [vmem:[%s1 + $0x3c] sm:$0xf]
  %v60 = vld [vmem:[%s2] sm:$0x1]
  %v62 = vperm.slane %v60, 0
  %v80 = vunpack.c.l.b16 %v28
  %v81 = vunpack.c.l.b16 %v29
  %v82 = vunpack.c.l.b16 %v30
  %v83 = vunpack.c.l.b16 %v31
  %v84 = vunpack.c.l.b16 %v32
  %v85 = vunpack.c.l.b16 %v33
  %v86 = vunpack.c.l.b16 %v34
  %v87 = vunpack.c.l.b16 %v35
  %v88 = vunpack.c.l.b16 %v36
  %v89 = vunpack.c.l.b16 %v37
  %v90 = vunpack.c.l.b16 %v38
  %v91 = vunpack.c.l.b16 %v39
  %v92 = vunpack.c.l.b16 %v40
  %v93 = vunpack.c.l.b16 %v41
  %v94 = vunpack.c.l.b16 %v42
  %v95 = vunpack.c.l.b16 %v43
  %v96 = vpack.c.b16 %v81, %v80
  %v97 = vpack.c.b16 %v83, %v82
  %v98 = vpack.c.b16 %v85, %v84
  %v99 = vpack.c.b16 %v87, %v86
  %v100 = vpack.c.b16 %v89, %v88
  %v101 = vpack.c.b16 %v91, %v90
  %v102 = vpack.c.b16 %v93, %v92
  %v103 = vpack.c.b16 %v95, %v94
  %v128 = vunpack.c.l.b16 %v44
  %v129 = vunpack.c.l.b16 %v45
  %v130 = vunpack.c.l.b16 %v46
  %v131 = vunpack.c.l.b16 %v47
  %v132 = vunpack.c.l.b16 %v48
  %v133 = vunpack.c.l.b16 %v49
  %v134 = vunpack.c.l.b16 %v50
  %v135 = vunpack.c.l.b16 %v51
  %v136 = vunpack.c.l.b16 %v52
  %v137 = vunpack.c.l.b16 %v53
  %v138 = vunpack.c.l.b16 %v54
  %v139 = vunpack.c.l.b16 %v55
  %v140 = vunpack.c.l.b16 %v56
  %v141 = vunpack.c.l.b16 %v57
  %v142 = vunpack.c.l.b16 %v58
  %v143 = vunpack.c.l.b16 %v59
  %v144 = vpack.c.b16 %v129, %v128
  %v145 = vpack.c.b16 %v131, %v130
  %v146 = vpack.c.b16 %v133, %v132
  %v147 = vpack.c.b16 %v135, %v134
  %v148 = vpack.c.b16 %v137, %v136
  %v149 = vpack.c.b16 %v139, %v138
  %v150 = vpack.c.b16 %v141, %v140
  %v151 = vpack.c.b16 %v143, %v142
  %160 = vmatpush.bf16.msra.mxu0 %v151
  %161 = vmatpush.bf16.msra.mxu0 %v150
  %162 = vmatpush.bf16.msra.mxu0 %v149
  %163 = vmatpush.bf16.msra.mxu0 %v148
  %164 = vmatpush.bf16.msra.mxu0 %v147
  %165 = vmatpush.bf16.msra.mxu0 %v146
  %166 = vmatpush.bf16.msra.mxu0 %v145
  %167 = vmatpush.bf16.msra.mxu0 %v144
  %168 = vmatmul.bf16.gmra.mxu0 %v96
  %v169 = vpop.f32.mrf.mxu0
  %v170 = vadd.f32 %v62, %v169
  %v171 = vpop.f32.mrf.mxu0
  %v172 = vadd.f32 %v62, %v171
  %173 = vmatmul.bf16.gmra.mxu0 %v97
  %v174 = vpop.f32.mrf.mxu0
  %v175 = vadd.f32 %v62, %v174
  %v176 = vpop.f32.mrf.mxu0
  %v177 = vadd.f32 %v62, %v176
  %178 = vmatmul.bf16.gmra.mxu0 %v98
  %v179 = vpop.f32.mrf.mxu0
  %v180 = vadd.f32 %v62, %v179
  %v181 = vpop.f32.mrf.mxu0
  %v182 = vadd.f32 %v62, %v181
  %183 = vmatmul.bf16.gmra.mxu0 %v99
  %v184 = vpop.f32.mrf.mxu0
  %v185 = vadd.f32 %v62, %v184
  %v186 = vpop.f32.mrf.mxu0
  %v187 = vadd.f32 %v62, %v186
  %188 = vmatmul.bf16.gmra.mxu0 %v100
  %v189 = vpop.f32.mrf.mxu0
  %v190 = vadd.f32 %v62, %v189
  %v191 = vpop.f32.mrf.mxu0
  %v192 = vadd.f32 %v62, %v191
  %193 = vmatmul.bf16.gmra.mxu0 %v101
  %v194 = vpop.f32.mrf.mxu0
  %v195 = vadd.f32 %v62, %v194
  %v196 = vpop.f32.mrf.mxu0
  %v197 = vadd.f32 %v62, %v196
  %198 = vmatmul.bf16.gmra.mxu0 %v102
  %v199 = vpop.f32.mrf.mxu0
  %v200 = vadd.f32 %v62, %v199
  %v201 = vpop.f32.mrf.mxu0
  %v202 = vadd.f32 %v62, %v201
  %203 = vmatmul.bf16.gmra.mxu0 %v103
  %v204 = vpop.f32.mrf.mxu0
  %v205 = vadd.f32 %v62, %v204
  %v206 = vpop.f32.mrf.mxu0
  %v207 = vadd.f32 %v62, %v206
  %208 = vdwg.mxu0
  %v209 = vmax.f32 %v170, 0.0
  %v210 = vmax.f32 %v172, 0.0
  %v211 = vmax.f32 %v175, 0.0
  %v212 = vmax.f32 %v177, 0.0
  %v213 = vmax.f32 %v180, 0.0
  %v214 = vmax.f32 %v182, 0.0
  %v215 = vmax.f32 %v185, 0.0
  %v216 = vmax.f32 %v187, 0.0
  %v217 = vmax.f32 %v190, 0.0
  %v218 = vmax.f32 %v192, 0.0
  %v219 = vmax.f32 %v195, 0.0
  %v220 = vmax.f32 %v197, 0.0
  %v221 = vmax.f32 %v200, 0.0
  %v222 = vmax.f32 %v202, 0.0
  %v223 = vmax.f32 %v205, 0.0
  %v224 = vmax.f32 %v207, 0.0
  %v225 = vpack.c.bf16 %v210, %v209
  %v226 = vpack.c.bf16 %v212, %v211
  %v227 = vpack.c.bf16 %v214, %v213
  %v228 = vpack.c.bf16 %v216, %v215
  %v229 = vpack.c.bf16 %v218, %v217
  %v230 = vpack.c.bf16 %v220, %v219
  %v231 = vpack.c.bf16 %v222, %v221
  %v232 = vpack.c.bf16 %v224, %v223
  %v233 = vld [vmem:[%s3] sm:$0xf]
  %v234 = vld [vmem:[%s3 + $0x4] sm:$0xf]
  %v235 = vld [vmem:[%s3 + $0x8] sm:$0xf]
  %v236 = vld [vmem:[%s3 + $0xc] sm:$0xf]
  %v237 = vld [vmem:[%s3 + $0x10] sm:$0xf]
  %v238 = vld [vmem:[%s3 + $0x14] sm:$0xf]
  %v239 = vld [vmem:[%s3 + $0x18] sm:$0xf]
  %v240 = vld [vmem:[%s3 + $0x1c] sm:$0xf]
  %v241 = vld [vmem:[%s3 + $0x20] sm:$0xf]
  %v242 = vld [vmem:[%s3 + $0x24] sm:$0xf]
  %v243 = vld [vmem:[%s3 + $0x28] sm:$0xf]
  %v244 = vld [vmem:[%s3 + $0x2c] sm:$0xf]
  %v245 = vld [vmem:[%s3 + $0x30] sm:$0xf]
  %v246 = vld [vmem:[%s3 + $0x34] sm:$0xf]
  %v247 = vld [vmem:[%s3 + $0x38] sm:$0xf]
  %v248 = vld [vmem:[%s3 + $0x3c] sm:$0xf]
  %v249 = vld [vmem:[%s4] sm:$0x1]
  %v251 = vperm.slane %v249, 0
  %v269 = vunpack.c.l.b16 %v233
  %v270 = vunpack.c.l.b16 %v234
  %v271 = vunpack.c.l.b16 %v235
  %v272 = vunpack.c.l.b16 %v236
  %v273 = vunpack.c.l.b16 %v237
  %v274 = vunpack.c.l.b16 %v238
  %v275 = vunpack.c.l.b16 %v239
  %v276 = vunpack.c.l.b16 %v240
  %v277 = vunpack.c.l.b16 %v241
  %v278 = vunpack.c.l.b16 %v242
  %v279 = vunpack.c.l.b16 %v243
  %v280 = vunpack.c.l.b16 %v244
  %v281 = vunpack.c.l.b16 %v245
  %v282 = vunpack.c.l.b16 %v246
  %v283 = vunpack.c.l.b16 %v247
  %v284 = vunpack.c.l.b16 %v248
  %v285 = vpack.c.b16 %v270, %v269
  %v286 = vpack.c.b16 %v272, %v271
  %v287 = vpack.c.b16 %v274, %v273
  %v288 = vpack.c.b16 %v276, %v275
  %v289 = vpack.c.b16 %v278, %v277
  %v290 = vpack.c.b16 %v280, %v279
  %v291 = vpack.c.b16 %v282, %v281
  %v292 = vpack.c.b16 %v284, %v283
  %301 = vmatpush.bf16.msra.mxu0 %v292
  %302 = vmatpush.bf16.msra.mxu0 %v291
  %303 = vmatpush.bf16.msra.mxu0 %v290
  %304 = vmatpush.bf16.msra.mxu0 %v289
  %305 = vmatpush.bf16.msra.mxu0 %v288
  %306 = vmatpush.bf16.msra.mxu0 %v287
  %307 = vmatpush.bf16.msra.mxu0 %v286
  %308 = vmatpush.bf16.msra.mxu0 %v285
  %309 = vmatmul.bf16.gmra.mxu0 %v225
  %v310 = vpop.f32.mrf.mxu0
  %v311 = vadd.f32 %v251, %v310
  %v312 = vpop.f32.mrf.mxu0
  %v313 = vadd.f32 %v251, %v312
  %314 = vmatmul.bf16.gmra.mxu0 %v226
  %v315 = vpop.f32.mrf.mxu0
  %v316 = vadd.f32 %v251, %v315
  %v317 = vpop.f32.mrf.mxu0
  %v318 = vadd.f32 %v251, %v317
  %319 = vmatmul.bf16.gmra.mxu0 %v227
  %v320 = vpop.f32.mrf.mxu0
  %v321 = vadd.f32 %v251, %v320
  %v322 = vpop.f32.mrf.mxu0
  %v323 = vadd.f32 %v251, %v322
  %324 = vmatmul.bf16.gmra.mxu0 %v228
  %v325 = vpop.f32.mrf.mxu0
  %v326 = vadd.f32 %v251, %v325
  %v327 = vpop.f32.mrf.mxu0
  %v328 = vadd.f32 %v251, %v327
  %329 = vmatmul.bf16.gmra.mxu0 %v229
  %v330 = vpop.f32.mrf.mxu0
  %v331 = vadd.f32 %v251, %v330
  %v332 = vpop.f32.mrf.mxu0
  %v333 = vadd.f32 %v251, %v332
  %334 = vmatmul.bf16.gmra.mxu0 %v230
  %v335 = vpop.f32.mrf.mxu0
  %v336 = vadd.f32 %v251, %v335
  %v337 = vpop.f32.mrf.mxu0
  %v338 = vadd.f32 %v251, %v337
  %339 = vmatmul.bf16.gmra.mxu0 %v231
  %v340 = vpop.f32.mrf.mxu0
  %v341 = vadd.f32 %v251, %v340
  %v342 = vpop.f32.mrf.mxu0
  %v343 = vadd.f32 %v251, %v342
  %344 = vmatmul.bf16.gmra.mxu0 %v232
  %v345 = vpop.f32.mrf.mxu0
  %v346 = vadd.f32 %v251, %v345
  %v347 = vpop.f32.mrf.mxu0
  %v348 = vadd.f32 %v251, %v347
  %349 = vdwg.mxu0
  %v350 = vmax.f32 %v311, 0.0
  %v351 = vmax.f32 %v313, 0.0
  %v352 = vmax.f32 %v316, 0.0
  %v353 = vmax.f32 %v318, 0.0
  %v354 = vmax.f32 %v321, 0.0
  %v355 = vmax.f32 %v323, 0.0
  %v356 = vmax.f32 %v326, 0.0
  %v357 = vmax.f32 %v328, 0.0
  %v358 = vmax.f32 %v331, 0.0
  %v359 = vmax.f32 %v333, 0.0
  %v360 = vmax.f32 %v336, 0.0
  %v361 = vmax.f32 %v338, 0.0
  %v362 = vmax.f32 %v341, 0.0
  %v363 = vmax.f32 %v343, 0.0
  %v364 = vmax.f32 %v346, 0.0
  %v365 = vmax.f32 %v348, 0.0
  %366 = vxpose.xlu0.b32.start [1/16] %v350, 128
  %367 = vxpose.xlu0.b32.cont [2/16] %v351, 128
  %368 = vxpose.xlu0.b32.cont [3/16] %v352, 128
  %369 = vxpose.xlu0.b32.cont [4/16] %v353, 128
  %370 = vxpose.xlu0.b32.cont [5/16] %v354, 128
  %371 = vxpose.xlu0.b32.cont [6/16] %v355, 128
  %372 = vxpose.xlu0.b32.cont [7/16] %v356, 128
  %373 = vxpose.xlu0.b32.cont [8/16] %v357, 128
  %374 = vxpose.xlu0.b32.cont [9/16] %v358, 128
  %375 = vxpose.xlu0.b32.cont [10/16] %v359, 128
  %376 = vxpose.xlu0.b32.cont [11/16] %v360, 128
  %377 = vxpose.xlu0.b32.cont [12/16] %v361, 128
  %378 = vxpose.xlu0.b32.cont [13/16] %v362, 128
  %379 = vxpose.xlu0.b32.cont [14/16] %v363, 128
  %380 = vxpose.xlu0.b32.cont [15/16] %v364, 128
  %381 = vxpose.xlu0.b32.end [16/16] %v365, 128
  %v382 = vpop.trf.xlu0
  %v383 = vpop.trf.xlu0
  %v384 = vpop.trf.xlu0
  %v385 = vpop.trf.xlu0
  %v386 = vpop.trf.xlu0
  %v387 = vpop.trf.xlu0
  %v388 = vpop.trf.xlu0
  %v389 = vpop.trf.xlu0
  %v390 = vpop.trf.xlu0
  %v391 = vpop.trf.xlu0
  %v392 = vpop.trf.xlu0
  %v393 = vpop.trf.xlu0
  %v394 = vpop.trf.xlu0
  %v395 = vpop.trf.xlu0
  %v396 = vpop.trf.xlu0
  %v397 = vpop.trf.xlu0
  %v398 = vld [vmem:[%s5] sm:$0xff]
  %v399 = vld [vmem:[%s5 + $0x8] sm:$0xff]
  %v400 = vld [vmem:[%s5 + $0x10] sm:$0xff]
  %v401 = vld [vmem:[%s5 + $0x18] sm:$0xff]
  %v402 = vld [vmem:[%s5 + $0x20] sm:$0xff]
  %v403 = vld [vmem:[%s5 + $0x28] sm:$0xff]
  %v404 = vld [vmem:[%s5 + $0x30] sm:$0xff]
  %v405 = vld [vmem:[%s5 + $0x38] sm:$0xff]
  %v406 = vld [vmem:[%s5 + $0x40] sm:$0xff]
  %v407 = vld [vmem:[%s5 + $0x48] sm:$0xff]
  %v408 = vld [vmem:[%s5 + $0x50] sm:$0xff]
  %v409 = vld [vmem:[%s5 + $0x58] sm:$0xff]
  %v410 = vld [vmem:[%s5 + $0x60] sm:$0xff]
  %v411 = vld [vmem:[%s5 + $0x68] sm:$0xff]
  %v412 = vld [vmem:[%s5 + $0x70] sm:$0xff]
  %v413 = vld [vmem:[%s5 + $0x78] sm:$0xff]
  %415 = vset.pattern.permute.xlu0 0
  %416 = vperm.xlu0 %415, %v398
  %v417 = vpop.permute.xlu0 %416
  %420 = vset.pattern.permute.xlu0 0
  %421 = vperm.xlu0 %420, %v399
  %v422 = vpop.permute.xlu0 %421
  %425 = vset.pattern.permute.xlu0 0
  %426 = vperm.xlu0 %425, %v400
  %v427 = vpop.permute.xlu0 %426
  %430 = vset.pattern.permute.xlu0 0
  %431 = vperm.xlu0 %430, %v401
  %v432 = vpop.permute.xlu0 %431
  %435 = vset.pattern.permute.xlu0 0
  %436 = vperm.xlu0 %435, %v402
  %v437 = vpop.permute.xlu0 %436
  %440 = vset.pattern.permute.xlu0 0
  %441 = vperm.xlu0 %440, %v403
  %v442 = vpop.permute.xlu0 %441
  %445 = vset.pattern.permute.xlu0 0
  %446 = vperm.xlu0 %445, %v404
  %v447 = vpop.permute.xlu0 %446
  %450 = vset.pattern.permute.xlu0 0
  %451 = vperm.xlu0 %450, %v405
  %v452 = vpop.permute.xlu0 %451
  %455 = vset.pattern.permute.xlu0 0
  %456 = vperm.xlu0 %455, %v406
  %v457 = vpop.permute.xlu0 %456
  %460 = vset.pattern.permute.xlu0 0
  %461 = vperm.xlu0 %460, %v407
  %v462 = vpop.permute.xlu0 %461
  %465 = vset.pattern.permute.xlu0 0
  %466 = vperm.xlu0 %465, %v408
  %v467 = vpop.permute.xlu0 %466
  %470 = vset.pattern.permute.xlu0 0
  %471 = vperm.xlu0 %470, %v409
  %v472 = vpop.permute.xlu0 %471
  %475 = vset.pattern.permute.xlu0 0
  %476 = vperm.xlu0 %475, %v410
  %v477 = vpop.permute.xlu0 %476
  %480 = vset.pattern.permute.xlu0 0
  %481 = vperm.xlu0 %480, %v411
  %v482 = vpop.permute.xlu0 %481
  %485 = vset.pattern.permute.xlu0 0
  %486 = vperm.xlu0 %485, %v412
  %v487 = vpop.permute.xlu0 %486
  %490 = vset.pattern.permute.xlu0 0
  %491 = vperm.xlu0 %490, %v413
  %v492 = vpop.permute.xlu0 %491
  %v494 = vmul.f32 %v382, %v417
  %v495 = vmul.f32 %v383, %v422
  %v496 = vmul.f32 %v384, %v427
  %v497 = vmul.f32 %v385, %v432
  %v498 = vmul.f32 %v386, %v437
  %v499 = vmul.f32 %v387, %v442
  %v500 = vmul.f32 %v388, %v447
  %v501 = vmul.f32 %v389, %v452
  %v502 = vmul.f32 %v390, %v457
  %v503 = vmul.f32 %v391, %v462
  %v504 = vmul.f32 %v392, %v467
  %v505 = vmul.f32 %v393, %v472
  %v506 = vmul.f32 %v394, %v477
  %v507 = vmul.f32 %v395, %v482
  %v508 = vmul.f32 %v396, %v487
  %v509 = vmul.f32 %v397, %v492
  %v510 = vadd.f32 %v494, %v495
  %v511 = vadd.f32 %v510, %v496
  %v512 = vadd.f32 %v511, %v497
  %v513 = vadd.f32 %v512, %v498
  %v514 = vadd.f32 %v513, %v499
  %v515 = vadd.f32 %v514, %v500
  %v516 = vadd.f32 %v515, %v501
  %v517 = vadd.f32 %v516, %v502
  %v518 = vadd.f32 %v517, %v503
  %v519 = vadd.f32 %v518, %v504
  %v520 = vadd.f32 %v519, %v505
  %v521 = vadd.f32 %v520, %v506
  %v522 = vadd.f32 %v521, %v507
  %v523 = vadd.f32 %v522, %v508
  %v524 = vadd.f32 %v523, %v509
  %v525 = vrot.slane %v524, 4
  %v526 = vadd.f32 %v524, %v525
  %v527 = vrot.slane %v526, 2
  %v528 = vadd.f32 %v526, %v527
  %v529 = vrot.slane %v528, 1
  %v530 = vadd.f32 %v528, %v529
  %v531 = vld [vmem:[#allocation2] sm:$0x1]
  %533 = vset.pattern.permute.xlu0 0
  %534 = vperm.xlu0 %533, %v531
  %v535 = vpop.permute.xlu0 %534
  %v537 = vperm.slane %v535, 0
  %v538 = vadd.f32 %v530, %v537
  %539 = vst [vmem:[%s7] sm:$0x1] %v538
  // Predicated region
  $region30: #{value_network_forward.1} parent=0 // pred_check
    _
  $region31: #{value_network_forward.1} parent=0 // pred_check_branch
    %541 = sbr.rel (0) target = $region33
  $region32: #{value_network_forward.1} parent=0 // pred_region
    _
  $region33: #{value_network_forward.1} parent=0 // pred_fallthru
    _
  // Predicated region
  $region34: #{value_network_forward.1} parent=0 // pred_check
    _
  $region35: #{value_network_forward.1} parent=0 // pred_check_branch
    %543 = sbr.rel (0) target = $region37
  $region36: #{value_network_forward.1} parent=0 // pred_region
    _
  $region37: #{value_network_forward.1} parent=0 // pred_fallthru
    _

</llo_original>
